<compile_context>
chip_gen: v5e
topology: v5e:2x2
jax: 0.10.0
libtpu: 0.0.40
codegen_flags: <defaults>
</compile_context>

<pallas_src>
import math

import jax
import jax.numpy as jnp
from jax import lax
from jax.experimental import pallas as pl
from jax.experimental.pallas import tpu as pltpu


# Large finite negative used for masking (avoids NaN from exp(-inf - (-inf))).
_NEG = -0.7 * float(jnp.finfo(jnp.float32).max)


def _round_up(a, m):
    return (a + m - 1) // m * m


def _tpu_vmem_capacity_bytes():
    try:
        return int(pltpu.get_tpu_info().vmem_capacity_bytes)
    except Exception:
        return 64 * 1024 * 1024  # conservative: v7x per-TensorCore VMEM


def _num_tensorcores():
    try:
        kind = jax.devices()[0].device_kind.lower()
    except Exception:
        return 1
    return 2 if ("v7" in kind or "tpu7" in kind) else 1


def _vmem_limit_bytes():
    cap = _tpu_vmem_capacity_bytes()
    limit = (cap * 3) // 4
    if _num_tensorcores() >= 2:
        limit = min(limit, 48 * 1024 * 1024)  # v7x: 64 MiB physical per core
    limit = min(limit, 100 * 1024 * 1024)
    return int(max(limit, 24 * 1024 * 1024))


# Probe for BlockSpec(pipeline_mode=pl.Buffered(1)) support (resident blocks).
try:
    pl.BlockSpec((8, 128), lambda i: (0, 0), pipeline_mode=pl.Buffered(1))
    _HAS_PIPELINE_MODE = True
except Exception:  # pragma: no cover - older jax
    _HAS_PIPELINE_MODE = False


# --------------------------------------------------------------------------
# Linear (y = x @ w.T + b) kernel, torch nn.Linear weight layout
# --------------------------------------------------------------------------

def _linear_kernel(x_ref, w_ref, b_ref, o_ref):
    acc = lax.dot_general(
        x_ref[...], w_ref[...],
        dimension_numbers=(((1,), (1,)), ((), ())),   # contract K with K (trans_b)
        preferred_element_type=jnp.float32)
    o_ref[...] = (acc + b_ref[...].astype(jnp.float32)).astype(o_ref.dtype)


def _linear_call(xp, w, b2, *, bm, resident_single, vmem_limit):
    Mp, K = xp.shape
    Nout = w.shape[0]
    res_kw = {"pipeline_mode": pl.Buffered(1)} if resident_single else {}
    flops = 2 * Mp * K * Nout
    bytes_accessed = (Mp * K * xp.dtype.itemsize
                      + Nout * K * w.dtype.itemsize
                      + Mp * Nout * xp.dtype.itemsize)
    return pl.pallas_call(
        _linear_kernel,
        out_shape=jax.ShapeDtypeStruct((Mp, Nout), xp.dtype),
        grid_spec=pltpu.PrefetchScalarGridSpec(
            num_scalar_prefetch=0,
            grid=(Mp // bm,),
            in_specs=[
                pl.BlockSpec((bm, K), lambda i: (i, 0)),
                pl.BlockSpec((Nout, K), lambda i: (0, 0), **res_kw),  # resident W
                pl.BlockSpec((1, Nout), lambda i: (0, 0), **res_kw),  # resident b
            ],
            out_specs=pl.BlockSpec((bm, Nout), lambda i: (i, 0)),
        ),
        compiler_params=pltpu.CompilerParams(
            dimension_semantics=("parallel",),
            vmem_limit_bytes=vmem_limit,
        ),
        cost_estimate=pl.CostEstimate(
            flops=flops, transcendentals=0, bytes_accessed=bytes_accessed),
    )(xp, w, b2)


def linear_pallas(x2d, w, b, *, bm_max=512):
    """x2d: (M, K); w: (Nout, K) (torch Linear layout); b: (Nout,) or None."""
    M, K = x2d.shape
    Nout, Kw = w.shape
    assert K == Kw
    if b is None:
        b = jnp.zeros((Nout,), x2d.dtype)
    b2 = b.reshape(1, Nout).astype(x2d.dtype)

    vmem_limit = _vmem_limit_bytes()
    budget = int(vmem_limit * 0.85)
    isz = x2d.dtype.itemsize
    w_bufs = 1 if _HAS_PIPELINE_MODE else 2
    w_bytes = Nout * K * w.dtype.itemsize * w_bufs

    Mp0 = _round_up(M, 8)
    bm = min(_round_up(bm_max, 8), Mp0)
    # Keep both TensorCores busy on multi-core chips (>= 2 grid steps).
    if _num_tensorcores() >= 2 and Mp0 >= 16:
        bm = min(bm, _round_up(Mp0 // 2, 8))

    def est(bm_):
        return w_bytes + bm_ * K * isz * 2 + bm_ * Nout * isz * 2 + Nout * isz * 2

    while bm > 8 and est(bm) > budget:
        bm = max(8, _round_up(bm // 2, 8))
    # TODO(synk): for very large C the resident (3C, C) weight itself may exceed
    # VMEM; that case would additionally need tiling over the output-feature axis.

    Mp = _round_up(M, bm)
    xp = x2d if Mp == M else jnp.pad(x2d, ((0, Mp - M), (0, 0)))

    if _HAS_PIPELINE_MODE:
        try:
            out = _linear_call(xp, w, b2, bm=bm, resident_single=True,
                               vmem_limit=vmem_limit)
        except Exception:  # pragma: no cover - fall back to default buffering
            out = _linear_call(xp, w, b2, bm=bm, resident_single=False,
                               vmem_limit=vmem_limit)
    else:
        out = _linear_call(xp, w, b2, bm=bm, resident_single=False,
                           vmem_limit=vmem_limit)
    return out[:M]


# --------------------------------------------------------------------------
# Flash-style attention core: softmax(q @ k^T [+ mask]) @ v
# --------------------------------------------------------------------------

def _make_flash_kernel(*, scale, mask_kind, l_valid, l_padded, block_k, use_bf16):
    neg = _NEG
    needs_pad_mask = l_padded != l_valid

    def kernel(*refs):
        if mask_kind == "none":
            q_ref, k_ref, v_ref, o_ref, m_sc, l_sc, acc_sc = refs
            mask_ref = None
        else:
            q_ref, k_ref, v_ref, mask_ref, o_ref, m_sc, l_sc, acc_sc = refs

        ki = pl.program_id(2)

        @pl.when(ki == 0)
        def _init():
            m_sc[...] = jnp.full_like(m_sc, neg)
            l_sc[...] = jnp.zeros_like(l_sc)
            acc_sc[...] = jnp.zeros_like(acc_sc)

        q = q_ref[...]
        k = k_ref[...]
        v = v_ref[...]
        if scale != 1.0:
            # 1/sqrt(head_dim) folded into the kernel (no wrapper HBM pass).
            q = q.astype(jnp.float32) * jnp.float32(scale)
        if use_bf16:
            q = q.astype(jnp.bfloat16)
            k = k.astype(jnp.bfloat16)
            v = v.astype(jnp.bfloat16)
        else:
            q = q.astype(k.dtype)

        s = jnp.einsum("bqd,bkd->bqk", q, k, preferred_element_type=jnp.float32)

        if mask_kind == "bool":
            m = mask_ref[...]
            if m.ndim == 2:
                m = m[None, :, :]
            s = jnp.where(m != 0, neg, s)
        elif mask_kind == "float":
            m = mask_ref[...].astype(jnp.float32)
            if m.ndim == 2:
                m = m[None, :, :]
            s = s + m

        if needs_pad_mask:
            col = ki * block_k + lax.broadcasted_iota(jnp.int32, s.shape, 2)
            s = jnp.where(col < l_valid, s, neg)

        m_prev = m_sc[...]
        m_new = jnp.maximum(m_prev, jnp.max(s, axis=-1, keepdims=True))
        alpha = jnp.exp(m_prev - m_new)
        p = jnp.exp(s - m_new)
        l_sc[...] = alpha * l_sc[...] + jnp.sum(p, axis=-1, keepdims=True)
        acc_sc[...] = alpha * acc_sc[...] + jnp.einsum(
            "bqk,bkd->bqd", p.astype(v.dtype), v,
            preferred_element_type=jnp.float32)
        m_sc[...] = m_new

        @pl.when(ki == pl.num_programs(2) - 1)
        def _finalize():
            inv_l = pl.reciprocal(l_sc[...], approx=True)
            # TODO(synk): for head_dim < 128 this store is lane-sparse (masked vst);
            # a heads-to-lanes transpose in-kernel would make it lane-dense.
            o_ref[...] = (acc_sc[...] * inv_l).astype(o_ref.dtype)

    return kernel


def attention_core_pallas(q, k, v, attn_mask=None, *, mask_kind="none",
                          scale=1.0, block_q=None, block_k=None, use_bf16=True):
    """q, k, v: (B*H, L, head_dim) -> (B*H, L, head_dim)."""
    assert (attn_mask is None) == (mask_kind == "none")
    BH, L, hd = q.shape
    out_dtype = q.dtype

    # ---- sequence tiling (same tile for q and kv) --------------------------
    lp0 = _round_up(L, 8)
    if block_q is not None:
        t = block_q
    elif block_k is not None:
        t = block_k
    else:
        t = 256
    t = max(8, _round_up(min(t, lp0), 8))
    if attn_mask is not None and t % 128 != 0:
        # Mask block's last dim must be 128-aligned or span the padded sequence.
        t = lp0 if lp0 <= 256 else _round_up(t, 128)
    lp = _round_up(L, t)
    num_q = lp // t
    num_kv = lp // t

    if lp != L:
        pad = ((0, 0), (0, lp - L), (0, 0))
        q = jnp.pad(q, pad)
        k = jnp.pad(k, pad)
        v = jnp.pad(v, pad)
        if attn_mask is not None:
            if attn_mask.ndim == 2:
                attn_mask = jnp.pad(attn_mask, ((0, lp - L), (0, lp - L)))
            else:
                attn_mask = jnp.pad(attn_mask, ((0, 0), (0, lp - L), (0, lp - L)))

    # ---- batch-head tiling against an explicit VMEM budget -----------------
    vmem_limit = _vmem_limit_bytes()
    budget = int(vmem_limit * 0.8)
    isz = q.dtype.itemsize
    osz = jnp.dtype(out_dtype).itemsize
    if attn_mask is None:
        msz, mask_per_bh = 0, False
    else:
        msz = attn_mask.dtype.itemsize
        mask_per_bh = attn_mask.ndim == 3

    def est(bh):
        qkv_b = 3 * bh * t * hd * isz * 2
        out_b = bh * t * hd * osz * 2
        scr_b = bh * t * (2 * 4 + hd * 4)
        mask_b = ((bh if mask_per_bh else 1) * t * t * msz * 2) if msz else 0
        tmp_b = 3 * bh * t * t * 4            # s, p and headroom for temporaries
        return qkv_b + out_b + scr_b + mask_b + tmp_b

    divisors = [d for d in range(BH, 0, -1) if BH % d == 0]
    fitting = [d for d in divisors if est(d) <= budget] or [1]
    bh_block = fitting[0]
    cores = _num_tensorcores()
    if cores >= 2:
        for d in fitting:
            steps = (BH // d) * num_q
            if steps >= cores and steps % cores == 0:
                bh_block = d
                break

    # ---- specs / call -------------------------------------------------------
    in_specs = [
        pl.BlockSpec((bh_block, t, hd), lambda b, qi, ki: (b, qi, 0)),
        pl.BlockSpec((bh_block, t, hd), lambda b, qi, ki: (b, ki, 0)),
        pl.BlockSpec((bh_block, t, hd), lambda b, qi, ki: (b, ki, 0)),
    ]
    args = [q, k, v]
    if attn_mask is not None:
        if attn_mask.ndim == 2:
            in_specs.append(pl.BlockSpec((t, t), lambda b, qi, ki: (qi, ki)))
        else:
            in_specs.append(
                pl.BlockSpec((bh_block, t, t), lambda b, qi, ki: (b, qi, ki)))
        args.append(attn_mask)

    kernel = _make_flash_kernel(scale=scale, mask_kind=mask_kind, l_valid=L,
                                l_padded=lp, block_k=t, use_bf16=use_bf16)

    flops = 4 * BH * lp * lp * hd
    transcendentals = BH * lp * lp
    bytes_accessed = (3 * BH * lp * hd * isz + BH * lp * hd * osz
                      + (BH if mask_per_bh else 1) * lp * lp * msz)

    out = pl.pallas_call(
        kernel,
        out_shape=jax.ShapeDtypeStruct((BH, lp, hd), out_dtype),
        grid_spec=pltpu.PrefetchScalarGridSpec(
            num_scalar_prefetch=0,
            grid=(BH // bh_block, num_q, num_kv),
            in_specs=in_specs,
            out_specs=pl.BlockSpec((bh_block, t, hd), lambda b, qi, ki: (b, qi, 0)),
            scratch_shapes=[
                pltpu.VMEM((bh_block, t, 1), jnp.float32),    # running max
                pltpu.VMEM((bh_block, t, 1), jnp.float32),    # running sum
                pltpu.VMEM((bh_block, t, hd), jnp.float32),   # fp32 accumulator
            ],
        ),
        compiler_params=pltpu.CompilerParams(
            dimension_semantics=("parallel", "parallel", "arbitrary"),
            vmem_limit_bytes=vmem_limit,
        ),
        cost_estimate=pl.CostEstimate(
            flops=flops, transcendentals=transcendentals,
            bytes_accessed=bytes_accessed),
    )(*args)
    return out[:, :L, :]


# --------------------------------------------------------------------------
# Full forward, mirroring open_clip Attention.forward
# --------------------------------------------------------------------------

def attention_forward(
    x,                      # (L, N, C)
    in_proj_weight,         # (3C, C)   torch layout (out, in)
    in_proj_bias,           # (3C,) or None
    out_proj_weight,        # (C, C)    torch layout (out, in)
    out_proj_bias,          # (C,)
    *,
    num_heads,
    attn_mask=None,         # (L, L) or (N*H, L, L), bool or float additive
    logit_scale=None,       # (H, 1, 1) if scaled_cosine
    head_scale=None,        # (H, 1, 1) if scale_heads
    logit_scale_max=math.log(1.0 / 0.01),
    block_q=None,
    block_k=None,
    use_bf16=True,
):
    L, N, C = x.shape
    H = num_heads
    hd = C // H
    scale = hd ** -0.5

    # QKV projection (MXU kernel, no weight transpose in HBM).
    x2d = x.reshape(L * N, C)
    qkv = linear_pallas(x2d, in_proj_weight, in_proj_bias)      # (L*N, 3C)
    qkv = qkv.reshape(L, N, 3 * C)
    q, k, v = jnp.split(qkv, 3, axis=-1)

    def to_bh(t):  # (L, N, C) -> (N*H, L, hd), matching view(L, N*H, hd).transpose(0, 1)
        return jnp.transpose(t.reshape(L, N * H, hd), (1, 0, 2))

    q, k, v = to_bh(q), to_bh(k), to_bh(v)

    if logit_scale is not None:
        # scaled-cosine attention: normalize q/k, learned per-head logit scale.
        q = q / jnp.maximum(jnp.linalg.norm(q, axis=-1, keepdims=True), 1e-12)
        k = k / jnp.maximum(jnp.linalg.norm(k, axis=-1, keepdims=True), 1e-12)
        ls = jnp.exp(jnp.minimum(logit_scale.reshape(H), logit_scale_max))
        q = q * jnp.tile(ls, N)[:, None, None]    # bh = n*H + h -> head index bh % H
        q_scale = 1.0
    else:
        q_scale = scale    # applied inside the attention kernel

    mask_kind = "none"
    if attn_mask is not None:
        if attn_mask.dtype == jnp.bool_:
            attn_mask = attn_mask.astype(jnp.int8)   # 1-byte DMA; select in-kernel
            mask_kind = "bool"
        else:
            attn_mask = attn_mask.astype(jnp.float32)
            mask_kind = "float"

    ctx = attention_core_pallas(q, k, v, attn_mask, mask_kind=mask_kind,
                                scale=q_scale, block_q=block_q, block_k=block_k,
                                use_bf16=use_bf16)              # (N*H, L, hd)
    # TODO(synk): attn_drop with p>0 (training) is not implemented (identity here).

    if head_scale is not None:
        # TODO(synk): the torch code views with C here (shape-inconsistent); the
        # intended per-head scaling over (N, H, L, head_dim) is applied instead.
        ctx = ctx.reshape(N, H, L, hd) * head_scale.reshape(1, H, 1, 1)
        ctx = ctx.reshape(N * H, L, hd)

    ctx = jnp.transpose(ctx, (1, 0, 2)).reshape(L * N, C)
    out = linear_pallas(ctx, out_proj_weight, out_proj_bias)
    # TODO(synk): out_drop with p>0 (training) is not implemented (identity here).
    return out.reshape(L, N, C)


# --------------------------------------------------------------------------
# Pure-JAX reference (mirrors the torch forward) + demo
# --------------------------------------------------------------------------

def reference_forward(x, Wi, bi, Wo, bo, num_heads, attn_mask=None,
                      logit_scale=None, head_scale=None,
                      logit_scale_max=math.log(1.0 / 0.01)):
    L, N, C = x.shape
    H = num_heads
    hd = C // H
    qkv = x @ Wi.T + bi
    q, k, v = jnp.split(qkv, 3, axis=-1)
    q = jnp.transpose(q.reshape(L, N * H, hd), (1, 0, 2))
    k = jnp.transpose(k.reshape(L, N * H, hd), (1, 0, 2))
    v = jnp.transpose(v.reshape(L, N * H, hd), (1, 0, 2))
    if logit_scale is not None:
        qn = q / jnp.maximum(jnp.linalg.norm(q, axis=-1, keepdims=True), 1e-12)
        kn = k / jnp.maximum(jnp.linalg.norm(k, axis=-1, keepdims=True), 1e-12)
        attn = jnp.einsum("bqd,bkd->bqk", qn, kn)
        ls = jnp.exp(jnp.minimum(logit_scale, logit_scale_max))   # (H,1,1)
        attn = attn.reshape(N, H, L, L) * ls
        attn = attn.reshape(N * H, L, L)
    else:
        attn = jnp.einsum("bqd,bkd->bqk", q * (hd ** -0.5), k)
    if attn_mask is not None:
        if attn_mask.dtype == jnp.bool_:
            attn_mask = jnp.where(attn_mask, -jnp.inf, 0.0)
        attn = attn + attn_mask
    attn = jax.nn.softmax(attn, axis=-1)
    ctx = jnp.einsum("bqk,bkd->bqd", attn, v)
    if head_scale is not None:
        ctx = ctx.reshape(N, H, L, hd) * head_scale.reshape(1, H, 1, 1)
        ctx = ctx.reshape(N * H, L, hd)
    ctx = jnp.transpose(ctx, (1, 0, 2)).reshape(L, N, C)
    return ctx @ Wo.T + bo


def _rel_err(a, b):
    return float(jnp.linalg.norm(a - b) / (jnp.linalg.norm(b) + 1e-12))


if __name__ == "__main__":
    key = jax.random.PRNGKey(0)
    kx, kw1, kb1, kw2, kb2, kx2, khs = jax.random.split(key, 7)

    # Small config: seq=8, batch=2, dim=128, heads=4 (head_dim=32).
    L, N, C, H = 8, 2, 128, 4
    hd = C // H
    scale = hd ** -0.5

    x = jax.random.normal(kx, (L, N, C), dtype=jnp.float32)
    Wi = jax.random.normal(kw1, (3 * C, C), dtype=jnp.float32) * scale
    bi = jax.random.normal(kb1, (3 * C,), dtype=jnp.float32) * 0.02
    Wo = jax.random.normal(kw2, (C, C), dtype=jnp.float32) * scale
    bo = jax.random.normal(kb2, (C,), dtype=jnp.float32) * 0.02

    # 1) Default path, no mask.
    out = jax.block_until_ready(attention_forward(x, Wi, bi, Wo, bo, num_heads=H))
    ref = reference_forward(x, Wi, bi, Wo, bo, H)
    assert out.shape == (L, N, C), out.shape
    assert _rel_err(out, ref) < 2e-2, _rel_err(out, ref)

    # 2) Longer sequence, no mask, small tiles -> exercises the flash-style
    #    multi-tile online softmax and the sequence-padding path.
    L2 = 50
    x2 = jax.random.normal(kx2, (L2, N, C), dtype=jnp.float32)
    out2 = jax.block_until_ready(
        attention_forward(x2, Wi, bi, Wo, bo, num_heads=H, block_q=16, block_k=16))
    ref2 = reference_forward(x2, Wi, bi, Wo, bo, H)
    assert _rel_err(out2, ref2) < 2e-2, _rel_err(out2, ref2)

    # 3) Boolean causal mask (True = masked), 128-wide tiles + padding.
    L3 = 200
    x3 = jax.random.normal(kx2, (L3, N, C), dtype=jnp.float32)
    causal = jnp.triu(jnp.ones((L3, L3), dtype=bool), k=1)
    out3 = jax.block_until_ready(
        attention_forward(x3, Wi, bi, Wo, bo, num_heads=H, attn_mask=causal,
                          block_q=128, block_k=128))
    ref3 = reference_forward(x3, Wi, bi, Wo, bo, H, attn_mask=causal)
    assert _rel_err(out3, ref3) < 2e-2, _rel_err(out3, ref3)

    # 4) scaled_cosine + scale_heads variants.
    logit_scale = jnp.log(10.0) * jnp.ones((H, 1, 1), dtype=jnp.float32)
    head_scale = 1.0 + 0.1 * jax.random.normal(khs, (H, 1, 1), dtype=jnp.float32)
    out4 = jax.block_until_ready(
        attention_forward(x, Wi, bi, Wo, bo, num_heads=H,
                          logit_scale=logit_scale, head_scale=head_scale))
    ref4 = reference_forward(x, Wi, bi, Wo, bo, H,
                             logit_scale=logit_scale, head_scale=head_scale)
    assert _rel_err(out4, ref4) < 2e-2, _rel_err(out4, ref4)

    print("KERNEL_OK")
</pallas_src>

<mosaic_0001>
module attributes {stable_mosaic.version = 11 : i64} {
  func.func @_linear_kernel(%arg0: i32, %arg1: memref<16x128xf32, #tpu.memory_space<vmem>>, %arg2: memref<384x128xf32, #tpu.memory_space<vmem>>, %arg3: memref<1x384xf32, #tpu.memory_space<vmem>>, %arg4: memref<16x384xf32, #tpu.memory_space<vmem>>) attributes {dimension_semantics = [#tpu.dimension_semantics<parallel>], iteration_bounds = array<i64: 1>, scalar_prefetch = 0 : i64, scratch_operands = 0 : i64, tpu.core_type = #tpu.core_type<tc>, window_params = [{transform_indices = @transform_0, window_bounds = array<i64: 16, 128>}, {pipeline_mode = #tpu.pipeline_mode<synchronous>, transform_indices = @transform_1, window_bounds = array<i64: 384, 128>}, {pipeline_mode = #tpu.pipeline_mode<synchronous>, transform_indices = @transform_2, window_bounds = array<i64: 1, 384>}, {transform_indices = @transform_3, window_bounds = array<i64: 16, 384>}]} {
    %c0 = arith.constant 0 : index
    %c0_0 = arith.constant 0 : index
    %0 = vector.load %arg1[%c0, %c0_0] : memref<16x128xf32, #tpu.memory_space<vmem>>, vector<16x128xf32>
    %c0_1 = arith.constant 0 : index
    %c0_2 = arith.constant 0 : index
    %1 = vector.load %arg2[%c0_1, %c0_2] : memref<384x128xf32, #tpu.memory_space<vmem>>, vector<384x128xf32>
    %cst = arith.constant dense<0.000000e+00> : vector<16x384xf32>
    %2 = tpu.matmul %0, %1, %cst {dimension_numbers = #tpu.dot_dimension_numbers<[1], [1], [0], [0], [0, 0, 1, 0], [], []>} : vector<16x128xf32>, vector<384x128xf32>, vector<16x384xf32> -> vector<16x384xf32>
    %c0_3 = arith.constant 0 : index
    %c0_4 = arith.constant 0 : index
    %3 = vector.load %arg3[%c0_3, %c0_4] : memref<1x384xf32, #tpu.memory_space<vmem>>, vector<1x384xf32>
    %4 = vector.broadcast %3 : vector<1x384xf32> to vector<16x384xf32>
    %5 = arith.addf %2, %4 : vector<16x384xf32>
    %c0_5 = arith.constant 0 : index
    %c0_6 = arith.constant 0 : index
    %6 = vector.load %arg4[%c0_5, %c0_6] : memref<16x384xf32, #tpu.memory_space<vmem>>, vector<16x384xf32>
    tpu.vector_store %arg4[%c0_5, %c0_6], %5 {strides = array<i32>} : memref<16x384xf32, #tpu.memory_space<vmem>>, vector<16x384xf32>,
    return
  }
  func.func @transform_0(%arg0: i32) -> (i32, i32) {
    %c0_i32 = arith.constant 0 : i32
    %c0_i32_0 = arith.constant 0 : i32
    return %arg0, %c0_i32 : i32, i32
  }
  func.func @transform_1(%arg0: i32) -> (i32, i32) {
    %c0_i32 = arith.constant 0 : i32
    %c0_i32_0 = arith.constant 0 : i32
    %c0_i32_1 = arith.constant 0 : i32
    return %c0_i32, %c0_i32_0 : i32, i32
  }
  func.func @transform_2(%arg0: i32) -> (i32, i32) {
    %c0_i32 = arith.constant 0 : i32
    %c0_i32_0 = arith.constant 0 : i32
    %c0_i32_1 = arith.constant 0 : i32
    return %c0_i32, %c0_i32_0 : i32, i32
  }
  func.func @transform_3(%arg0: i32) -> (i32, i32) {
    %c0_i32 = arith.constant 0 : i32
    %c0_i32_0 = arith.constant 0 : i32
    return %arg0, %c0_i32 : i32, i32
  }
}

module attributes {stable_mosaic.version = 11 : i64} {
  func.func @_linear_kernel(%arg0: i32, %arg1: memref<16x128xf32, #tpu.memory_space<vmem>>, %arg2: memref<384x128xf32, #tpu.memory_space<vmem>>, %arg3: memref<1x384xf32, #tpu.memory_space<vmem>>, %arg4: memref<16x384xf32, #tpu.memory_space<vmem>>) attributes {dimension_semantics = [#tpu.dimension_semantics<parallel>], iteration_bounds = array<i64: 1>, scalar_prefetch = 0 : i64, scratch_operands = 0 : i64, tpu.core_type = #tpu.core_type<tc>, window_params = [{transform_indices = @transform_0, window_bounds = array<i64: 16, 128>}, {pipeline_mode = #tpu.pipeline_mode<synchronous>, transform_indices = @transform_1, window_bounds = array<i64: 384, 128>}, {pipeline_mode = #tpu.pipeline_mode<synchronous>, transform_indices = @transform_2, window_bounds = array<i64: 1, 384>}, {transform_indices = @transform_3, window_bounds = array<i64: 16, 384>}]} {
    %c0 = arith.constant 0 : index
    %c0_0 = arith.constant 0 : index
    %0 = vector.load %arg1[%c0, %c0_0] : memref<16x128xf32, #tpu.memory_space<vmem>>, vector<16x128xf32>
    %c0_1 = arith.constant 0 : index
    %c0_2 = arith.constant 0 : index
    %1 = vector.load %arg2[%c0_1, %c0_2] : memref<384x128xf32, #tpu.memory_space<vmem>>, vector<384x128xf32>
    %cst = arith.constant dense<0.000000e+00> : vector<16x384xf32>
    %2 = tpu.matmul %0, %1, %cst {dimension_numbers = #tpu.dot_dimension_numbers<[1], [1], [0], [0], [0, 0, 1, 0], [], []>} : vector<16x128xf32>, vector<384x128xf32>, vector<16x384xf32> -> vector<16x384xf32>
    %c0_3 = arith.constant 0 : index
    %c0_4 = arith.constant 0 : index
    %3 = vector.load %arg3[%c0_3, %c0_4] : memref<1x384xf32, #tpu.memory_space<vmem>>, vector<1x384xf32>
    %4 = vector.broadcast %3 : vector<1x384xf32> to vector<16x384xf32>
    %5 = arith.addf %2, %4 : vector<16x384xf32>
    %c0_5 = arith.constant 0 : index
    %c0_6 = arith.constant 0 : index
    %6 = vector.load %arg4[%c0_5, %c0_6] : memref<16x384xf32, #tpu.memory_space<vmem>>, vector<16x384xf32>
    tpu.vector_store %arg4[%c0_5, %c0_6], %5 {strides = array<i32>} : memref<16x384xf32, #tpu.memory_space<vmem>>, vector<16x384xf32>,
    return
  }
  func.func @transform_0(%arg0: i32) -> (i32, i32) {
    %c0_i32 = arith.constant 0 : i32
    %c0_i32_0 = arith.constant 0 : i32
    return %arg0, %c0_i32 : i32, i32
  }
  func.func @transform_1(%arg0: i32) -> (i32, i32) {
    %c0_i32 = arith.constant 0 : i32
    %c0_i32_0 = arith.constant 0 : i32
    %c0_i32_1 = arith.constant 0 : i32
    return %c0_i32, %c0_i32_0 : i32, i32
  }
  func.func @transform_2(%arg0: i32) -> (i32, i32) {
    %c0_i32 = arith.constant 0 : i32
    %c0_i32_0 = arith.constant 0 : i32
    %c0_i32_1 = arith.constant 0 : i32
    return %c0_i32, %c0_i32_0 : i32, i32
  }
  func.func @transform_3(%arg0: i32) -> (i32, i32) {
    %c0_i32 = arith.constant 0 : i32
    %c0_i32_0 = arith.constant 0 : i32
    return %arg0, %c0_i32 : i32, i32
  }
}

</mosaic_0001>

<llo_original>
// kernel: tpu_custom_call.1
$region0: #{tpu_custom_call.1}
  #allocation0 [shape = 'u32[]', space=smem, size = 0x4, offset = 0x4, fixed_abs, tag = 'smem constant byte address 0x4 - core index']
  #allocation1 [shape = 'u32[72,128]{1,0:T(1,128)}', space=vmem, size = 0x9000, scoped, tag = 'internal scratch']
  %s0 = inlined_call_operand.hbm [shape: f32[16,128], index: 0, kind: input, shape index: {}]
  %s1 = inlined_call_operand.hbm [shape: f32[384,128], index: 1, kind: input, shape index: {}]
  %s2 = inlined_call_operand.hbm [shape: f32[1,384], index: 2, kind: input, shape index: {}]
  %s3 = inlined_call_operand.hbm [shape: f32[16,384], index: 3, kind: output, shape index: {}]
  %s4 = sld [smem:[#allocation0]]
  $region34: #{tpu_custom_call.1} parent=0
    _
  %s6 = ssub.s32 1, %s4
  %s7 = scalar_select 0, %s6, %s4
  $region1: #{tpu_custom_call.1} parent=0
    #allocation2 [shape = 'u8[8192]{0}', space=vmem, size = 0x2000, scoped, tag = 'input window, operand 0, single buffered']
    #allocation3 [shape = 's32[1]{0}', space=sflag, size = 0x4, scoped, tag = 'scoped memory for tpu_custom_call.1']
    #allocation4 [shape = 's32[1]{0}', space=sflag, size = 0x4, scoped, tag = 'scoped memory for tpu_custom_call.1']
    #allocation5 [shape = 'u8[196608]{0}', space=vmem, size = 0x30000, scoped, tag = 'input window, operand 1, single buffered']
    #allocation6 [shape = 's32[1]{0}', space=sflag, size = 0x4, scoped, tag = 'scoped memory for tpu_custom_call.1']
    #allocation7 [shape = 'u8[1536]{0}', space=vmem, size = 0x800, scoped, tag = 'input window, operand 2, single buffered']
    #allocation8 [shape = 'u8[24576]{0}', space=vmem, size = 0x6000, scoped, tag = 'output window, operand 0, single buffered']
    %8 = vsyncpa [#allocation3], 0
    %9 = vsyncpa [#allocation6], 0
    %10 = vsyncpa [#allocation4], 0
    // Predicated region
    $region2: #{tpu_custom_call.1} parent=1 // pred_check
      _
    $region3: #{tpu_custom_call.1} parent=1 // pred_check_branch
      %12 = sbr.rel (0) target = $region5
    $region4: #{tpu_custom_call.1} parent=1 // pred_region
      %14 = vsyncadd [#allocation3], 0
      %s15 = sshll.u32 %s0, 4
      %s16 = int_to_ptr.hbm [resolvable:$true] %s15
      %s17 = sshll.u32 [#allocation2], 4
      %s18 = int_to_ptr.vmem [resolvable:$true] %s17
      %23 = dma.hbm_to_vmem [thread:$0]  %s16, 256, %s18, [#allocation3], 128, 128, 8
    $region5: #{tpu_custom_call.1} parent=1 // pred_fallthru
      _
    // Predicated region
    $region6: #{tpu_custom_call.1} parent=1 // pred_check
      _
    $region7: #{tpu_custom_call.1} parent=1 // pred_check_branch
      %25 = sbr.rel (0) target = $region9
    $region8: #{tpu_custom_call.1} parent=1 // pred_region
      %27 = vsyncadd [#allocation6], 0
      %s28 = sshll.u32 %s1, 4
      %s29 = int_to_ptr.hbm [resolvable:$true] %s28
      %s30 = sshll.u32 [#allocation5], 4
      %s31 = int_to_ptr.vmem [resolvable:$true] %s30
      %36 = dma.hbm_to_vmem [thread:$0]  %s29, 6144, %s31, [#allocation6], 128, 128, 8
    $region9: #{tpu_custom_call.1} parent=1 // pred_fallthru
      _
    // Predicated region
    $region10: #{tpu_custom_call.1} parent=1 // pred_check
      _
    $region11: #{tpu_custom_call.1} parent=1 // pred_check_branch
      %38 = sbr.rel (0) target = $region13
    $region12: #{tpu_custom_call.1} parent=1 // pred_region
      %40 = vsyncadd [#allocation6], 0
      %s42 = sshll.u32 %s2, 4
      %s43 = int_to_ptr.hbm [resolvable:$true] %s42
      %s44 = sshll.u32 [#allocation7], 4
      %s45 = int_to_ptr.vmem [resolvable:$true] %s44
      %47 = dma.hbm_to_vmem [thread:$0]  %s43, 48, %s45, [#allocation6]
    $region13: #{tpu_custom_call.1} parent=1 // pred_fallthru
      _
    // Predicated region
    $region14: #{tpu_custom_call.1} parent=1 // pred_check
      _
    $region15: #{tpu_custom_call.1} parent=1 // pred_check_branch
      %49 = sbr.rel (0) target = $region17
    $region16: #{tpu_custom_call.1} parent=1 // pred_region
      %51 = dma.done [#allocation3], 256
    $region17: #{tpu_custom_call.1} parent=1 // pred_fallthru
      _
    // Predicated region
    $region18: #{tpu_custom_call.1} parent=1 // pred_check
      _
    $region19: #{tpu_custom_call.1} parent=1 // pred_check_branch
      %53 = sbr.rel (0) target = $region21
    $region20: #{tpu_custom_call.1} parent=1 // pred_region
      %55 = dma.done [#allocation6], 6144
    $region21: #{tpu_custom_call.1} parent=1 // pred_fallthru
      _
    // Predicated region
    $region22: #{tpu_custom_call.1} parent=1 // pred_check
      _
    $region23: #{tpu_custom_call.1} parent=1 // pred_check_branch
      %57 = sbr.rel (0) target = $region25
    $region24: #{tpu_custom_call.1} parent=1 // pred_region
      %59 = dma.done [#allocation6], 48
    $region25: #{tpu_custom_call.1} parent=1 // pred_fallthru
      _
    %v60 = vld [vmem:[#allocation2] sm:$0xff]
    %v61 = vld [vmem:[#allocation2 + $0x8] sm:$0xff]
    %v62 = vld [vmem:[#allocation5] sm:$0xff]
    %v63 = vld [vmem:[#allocation5 + $0x8] sm:$0xff]
    %v64 = vld [vmem:[#allocation5 + $0x10] sm:$0xff]
    %v65 = vld [vmem:[#allocation5 + $0x18] sm:$0xff]
    %v66 = vld [vmem:[#allocation5 + $0x20] sm:$0xff]
    %v67 = vld [vmem:[#allocation5 + $0x28] sm:$0xff]
    %v68 = vld [vmem:[#allocation5 + $0x30] sm:$0xff]
    %v69 = vld [vmem:[#allocation5 + $0x38] sm:$0xff]
    %v70 = vld [vmem:[#allocation5 + $0x40] sm:$0xff]
    %v71 = vld [vmem:[#allocation5 + $0x48] sm:$0xff]
    %v72 = vld [vmem:[#allocation5 + $0x50] sm:$0xff]
    %v73 = vld [vmem:[#allocation5 + $0x58] sm:$0xff]
    %v74 = vld [vmem:[#allocation5 + $0x60] sm:$0xff]
    %v75 = vld [vmem:[#allocation5 + $0x68] sm:$0xff]
    %v76 = vld [vmem:[#allocation5 + $0x70] sm:$0xff]
    %v77 = vld [vmem:[#allocation5 + $0x78] sm:$0xff]
    %v78 = vld [vmem:[#allocation5 + $0x80] sm:$0xff]
    %v79 = vld [vmem:[#allocation5 + $0x88] sm:$0xff]
    %v80 = vld [vmem:[#allocation5 + $0x90] sm:$0xff]
    %v81 = vld [vmem:[#allocation5 + $0x98] sm:$0xff]
    %v82 = vld [vmem:[#allocation5 + $0xa0] sm:$0xff]
    %v83 = vld [vmem:[#allocation5 + $0xa8] sm:$0xff]
    %v84 = vld [vmem:[#allocation5 + $0xb0] sm:$0xff]
    %v85 = vld [vmem:[#allocation5 + $0xb8] sm:$0xff]
    %v86 = vld [vmem:[#allocation5 + $0xc0] sm:$0xff]
    %v87 = vld [vmem:[#allocation5 + $0xc8] sm:$0xff]
    %v88 = vld [vmem:[#allocation5 + $0xd0] sm:$0xff]
    %v89 = vld [vmem:[#allocation5 + $0xd8] sm:$0xff]
    %v90 = vld [vmem:[#allocation5 + $0xe0] sm:$0xff]
    %v91 = vld [vmem:[#allocation5 + $0xe8] sm:$0xff]
    %v92 = vld [vmem:[#allocation5 + $0xf0] sm:$0xff]
    %v93 = vld [vmem:[#allocation5 + $0xf8] sm:$0xff]
    %v94 = vld [vmem:[#allocation5 + $0x100] sm:$0xff]
    %v95 = vld [vmem:[#allocation5 + $0x108] sm:$0xff]
    %v96 = vld [vmem:[#allocation5 + $0x110] sm:$0xff]
    %v97 = vld [vmem:[#allocation5 + $0x118] sm:$0xff]
    %v98 = vld [vmem:[#allocation5 + $0x120] sm:$0xff]
    %v99 = vld [vmem:[#allocation5 + $0x128] sm:$0xff]
    %v100 = vld [vmem:[#allocation5 + $0x130] sm:$0xff]
    %v101 = vld [vmem:[#allocation5 + $0x138] sm:$0xff]
    %v102 = vld [vmem:[#allocation5 + $0x140] sm:$0xff]
    %v103 = vld [vmem:[#allocation5 + $0x148] sm:$0xff]
    %v104 = vld [vmem:[#allocation5 + $0x150] sm:$0xff]
    %v105 = vld [vmem:[#allocation5 + $0x158] sm:$0xff]
    %v106 = vld [vmem:[#allocation5 + $0x160] sm:$0xff]
    %v107 = vld [vmem:[#allocation5 + $0x168] sm:$0xff]
    %v108 = vld [vmem:[#allocation5 + $0x170] sm:$0xff]
    %v109 = vld [vmem:[#allocation5 + $0x178] sm:$0xff]
    %v110 = vld [vmem:[#allocation7] sm:$0x7]
    %v112 = vperm.slane %v110, 0
    %v113 = vperm.slane %v110, 1
    %v114 = vperm.slane %v110, 2
    %118 = vmatpush.xpose.msra.mxu0 %v77
    %119 = vmatpush.xpose.msra.mxu0 %v76
    %120 = vmatpush.xpose.msra.mxu0 %v75
    %121 = vmatpush.xpose.msra.mxu0 %v74
    %122 = vmatpush.xpose.msra.mxu0 %v73
    %123 = vmatpush.xpose.msra.mxu0 %v72
    %124 = vmatpush.xpose.msra.mxu0 %v71
    %125 = vmatpush.xpose.msra.mxu0 %v70
    %126 = vmatpush.xpose.msra.mxu0 %v69
    %127 = vmatpush.xpose.msra.mxu0 %v68
    %128 = vmatpush.xpose.msra.mxu0 %v67
    %129 = vmatpush.xpose.msra.mxu0 %v66
    %130 = vmatpush.xpose.msra.mxu0 %v65
    %131 = vmatpush.xpose.msra.mxu0 %v64
    %132 = vmatpush.xpose.msra.mxu0 %v63
    %133 = vmatpush.xpose.msra.mxu0 %v62
    %134 = vmatmul.f32.gmra.mxu0 %v60
    %v135 = vpop.f32.mrf.mxu0
    %v136 = vadd.f32 %v112, %v135
    %137 = vmatmul.f32.gmra.mxu0 %v61
    %v138 = vpop.f32.mrf.mxu0
    %v139 = vadd.f32 %v112, %v138
    %140 = vdwg.mxu0
    %141 = vmatpush.xpose.msra.mxu0 %v93
    %142 = vmatpush.xpose.msra.mxu0 %v92
    %143 = vmatpush.xpose.msra.mxu0 %v91
    %144 = vmatpush.xpose.msra.mxu0 %v90
    %145 = vmatpush.xpose.msra.mxu0 %v89
    %146 = vmatpush.xpose.msra.mxu0 %v88
    %147 = vmatpush.xpose.msra.mxu0 %v87
    %148 = vmatpush.xpose.msra.mxu0 %v86
    %149 = vmatpush.xpose.msra.mxu0 %v85
    %150 = vmatpush.xpose.msra.mxu0 %v84
    %151 = vmatpush.xpose.msra.mxu0 %v83
    %152 = vmatpush.xpose.msra.mxu0 %v82
    %153 = vmatpush.xpose.msra.mxu0 %v81
    %154 = vmatpush.xpose.msra.mxu0 %v80
    %155 = vmatpush.xpose.msra.mxu0 %v79
    %156 = vmatpush.xpose.msra.mxu0 %v78
    %157 = vmatmul.f32.gmra.mxu0 %v60
    %v158 = vpop.f32.mrf.mxu0
    %v159 = vadd.f32 %v113, %v158
    %160 = vmatmul.f32.gmra.mxu0 %v61
    %v161 = vpop.f32.mrf.mxu0
    %v162 = vadd.f32 %v113, %v161
    %163 = vdwg.mxu0
    %164 = vmatpush.xpose.msra.mxu0 %v109
    %165 = vmatpush.xpose.msra.mxu0 %v108
    %166 = vmatpush.xpose.msra.mxu0 %v107
    %167 = vmatpush.xpose.msra.mxu0 %v106
    %168 = vmatpush.xpose.msra.mxu0 %v105
    %169 = vmatpush.xpose.msra.mxu0 %v104
    %170 = vmatpush.xpose.msra.mxu0 %v103
    %171 = vmatpush.xpose.msra.mxu0 %v102
    %172 = vmatpush.xpose.msra.mxu0 %v101
    %173 = vmatpush.xpose.msra.mxu0 %v100
    %174 = vmatpush.xpose.msra.mxu0 %v99
    %175 = vmatpush.xpose.msra.mxu0 %v98
    %176 = vmatpush.xpose.msra.mxu0 %v97
    %177 = vmatpush.xpose.msra.mxu0 %v96
    %178 = vmatpush.xpose.msra.mxu0 %v95
    %179 = vmatpush.xpose.msra.mxu0 %v94
    %180 = vmatmul.f32.gmra.mxu0 %v60
    %v181 = vpop.f32.mrf.mxu0
    %v182 = vadd.f32 %v114, %v181
    %183 = vmatmul.f32.gmra.mxu0 %v61
    %v184 = vpop.f32.mrf.mxu0
    %v185 = vadd.f32 %v114, %v184
    %186 = vdwg.mxu0
    %187 = vst [vmem:[#allocation8] sm:$0xff] %v136
    %188 = vst [vmem:[#allocation8 + $0x8] sm:$0xff] %v159
    %189 = vst [vmem:[#allocation8 + $0x10] sm:$0xff] %v182
    %190 = vst [vmem:[#allocation8 + $0x18] sm:$0xff] %v139
    %191 = vst [vmem:[#allocation8 + $0x20] sm:$0xff] %v162
    %192 = vst [vmem:[#allocation8 + $0x28] sm:$0xff] %v185
    // Predicated region
    $region26: #{tpu_custom_call.1} parent=1 // pred_check
      _
    $region27: #{tpu_custom_call.1} parent=1 // pred_check_branch
      %194 = sbr.rel (0) target = $region29
    $region28: #{tpu_custom_call.1} parent=1 // pred_region
      %196 = vsyncadd [#allocation4], 0
      %s197 = sshll.u32 [#allocation8], 4
      %s198 = int_to_ptr.vmem [resolvable:$true] %s197
      %s199 = sshll.u32 %s3, 4
      %s200 = int_to_ptr.hbm [resolvable:$true] %s199
      %205 = dma.vmem_to_hbm [thread:$0]  %s198, 768, %s200, [#allocation4], 384, 384, 24
    $region29: #{tpu_custom_call.1} parent=1 // pred_fallthru
      _
    // Predicated region
    $region30: #{tpu_custom_call.1} parent=1 // pred_check
      _
    $region31: #{tpu_custom_call.1} parent=1 // pred_check_branch
      %207 = sbr.rel (0) target = $region33
    $region32: #{tpu_custom_call.1} parent=1 // pred_region
      %209 = dma.done [#allocation4], 768
    $region33: #{tpu_custom_call.1} parent=1 // pred_fallthru
      _
    %210 = vsyncpa [#allocation3], 1
    %211 = vsyncpa [#allocation6], 1
    %212 = vsyncpa [#allocation4], 1

// kernel: tpu_custom_call.1
$region0: #{tpu_custom_call.1}
  #allocation0 [shape = 'u32[]', space=smem, size = 0x4, offset = 0x4, fixed_abs, tag = 'smem constant byte address 0x4 - core index']
  #allocation1 [shape = 'u32[72,128]{1,0:T(1,128)}', space=vmem, size = 0x9000, scoped, tag = 'internal scratch']
  %s0 = inlined_call_operand.hbm [shape: f32[16,128], index: 0, kind: input, shape index: {}]
  %s1 = inlined_call_operand.hbm [shape: f32[384,128], index: 1, kind: input, shape index: {}]
  %s2 = inlined_call_operand.hbm [shape: f32[1,384], index: 2, kind: input, shape index: {}]
  %s3 = inlined_call_operand.hbm [shape: f32[16,384], index: 3, kind: output, shape index: {}]
  %s4 = sld [smem:[#allocation0]]
  $region34: #{tpu_custom_call.1} parent=0
    _
  %s6 = ssub.s32 1, %s4
  %s7 = scalar_select 0, %s6, %s4
  $region1: #{tpu_custom_call.1} parent=0
    #allocation2 [shape = 'u8[8192]{0}', space=vmem, size = 0x2000, scoped, tag = 'input window, operand 0, single buffered']
    #allocation3 [shape = 's32[1]{0}', space=sflag, size = 0x4, scoped, tag = 'scoped memory for tpu_custom_call.1']
    #allocation4 [shape = 's32[1]{0}', space=sflag, size = 0x4, scoped, tag = 'scoped memory for tpu_custom_call.1']
    #allocation5 [shape = 'u8[196608]{0}', space=vmem, size = 0x30000, scoped, tag = 'input window, operand 1, single buffered']
    #allocation6 [shape = 's32[1]{0}', space=sflag, size = 0x4, scoped, tag = 'scoped memory for tpu_custom_call.1']
    #allocation7 [shape = 'u8[1536]{0}', space=vmem, size = 0x800, scoped, tag = 'input window, operand 2, single buffered']
    #allocation8 [shape = 'u8[24576]{0}', space=vmem, size = 0x6000, scoped, tag = 'output window, operand 0, single buffered']
    %8 = vsyncpa [#allocation3], 0
    %9 = vsyncpa [#allocation6], 0
    %10 = vsyncpa [#allocation4], 0
    // Predicated region
    $region2: #{tpu_custom_call.1} parent=1 // pred_check
      _
    $region3: #{tpu_custom_call.1} parent=1 // pred_check_branch
      %12 = sbr.rel (0) target = $region5
    $region4: #{tpu_custom_call.1} parent=1 // pred_region
      %14 = vsyncadd [#allocation3], 0
      %s15 = sshll.u32 %s0, 4
      %s16 = int_to_ptr.hbm [resolvable:$true] %s15
      %s17 = sshll.u32 [#allocation2], 4
      %s18 = int_to_ptr.vmem [resolvable:$true] %s17
      %23 = dma.hbm_to_vmem [thread:$0]  %s16, 256, %s18, [#allocation3], 128, 128, 8
    $region5: #{tpu_custom_call.1} parent=1 // pred_fallthru
      _
    // Predicated region
    $region6: #{tpu_custom_call.1} parent=1 // pred_check
      _
    $region7: #{tpu_custom_call.1} parent=1 // pred_check_branch
      %25 = sbr.rel (0) target = $region9
    $region8: #{tpu_custom_call.1} parent=1 // pred_region
      %27 = vsyncadd [#allocation6], 0
      %s28 = sshll.u32 %s1, 4
      %s29 = int_to_ptr.hbm [resolvable:$true] %s28
      %s30 = sshll.u32 [#allocation5], 4
      %s31 = int_to_ptr.vmem [resolvable:$true] %s30
      %36 = dma.hbm_to_vmem [thread:$0]  %s29, 6144, %s31, [#allocation6], 128, 128, 8
    $region9: #{tpu_custom_call.1} parent=1 // pred_fallthru
      _
    // Predicated region
    $region10: #{tpu_custom_call.1} parent=1 // pred_check
      _
    $region11: #{tpu_custom_call.1} parent=1 // pred_check_branch
      %38 = sbr.rel (0) target = $region13
    $region12: #{tpu_custom_call.1} parent=1 // pred_region
      %40 = vsyncadd [#allocation6], 0
      %s42 = sshll.u32 %s2, 4
      %s43 = int_to_ptr.hbm [resolvable:$true] %s42
      %s44 = sshll.u32 [#allocation7], 4
      %s45 = int_to_ptr.vmem [resolvable:$true] %s44
      %47 = dma.hbm_to_vmem [thread:$0]  %s43, 48, %s45, [#allocation6]
    $region13: #{tpu_custom_call.1} parent=1 // pred_fallthru
      _
    // Predicated region
    $region14: #{tpu_custom_call.1} parent=1 // pred_check
      _
    $region15: #{tpu_custom_call.1} parent=1 // pred_check_branch
      %49 = sbr.rel (0) target = $region17
    $region16: #{tpu_custom_call.1} parent=1 // pred_region
      %51 = dma.done [#allocation3], 256
    $region17: #{tpu_custom_call.1} parent=1 // pred_fallthru
      _
    // Predicated region
    $region18: #{tpu_custom_call.1} parent=1 // pred_check
      _
    $region19: #{tpu_custom_call.1} parent=1 // pred_check_branch
      %53 = sbr.rel (0) target = $region21
    $region20: #{tpu_custom_call.1} parent=1 // pred_region
      %55 = dma.done [#allocation6], 6144
    $region21: #{tpu_custom_call.1} parent=1 // pred_fallthru
      _
    // Predicated region
    $region22: #{tpu_custom_call.1} parent=1 // pred_check
      _
    $region23: #{tpu_custom_call.1} parent=1 // pred_check_branch
      %57 = sbr.rel (0) target = $region25
    $region24: #{tpu_custom_call.1} parent=1 // pred_region
      %59 = dma.done [#allocation6], 48
    $region25: #{tpu_custom_call.1} parent=1 // pred_fallthru
      _
    %v60 = vld [vmem:[#allocation2] sm:$0xff]
    %v61 = vld [vmem:[#allocation2 + $0x8] sm:$0xff]
    %v62 = vld [vmem:[#allocation5] sm:$0xff]
    %v63 = vld [vmem:[#allocation5 + $0x8] sm:$0xff]
    %v64 = vld [vmem:[#allocation5 + $0x10] sm:$0xff]
    %v65 = vld [vmem:[#allocation5 + $0x18] sm:$0xff]
    %v66 = vld [vmem:[#allocation5 + $0x20] sm:$0xff]
    %v67 = vld [vmem:[#allocation5 + $0x28] sm:$0xff]
    %v68 = vld [vmem:[#allocation5 + $0x30] sm:$0xff]
    %v69 = vld [vmem:[#allocation5 + $0x38] sm:$0xff]
    %v70 = vld [vmem:[#allocation5 + $0x40] sm:$0xff]
    %v71 = vld [vmem:[#allocation5 + $0x48] sm:$0xff]
    %v72 = vld [vmem:[#allocation5 + $0x50] sm:$0xff]
    %v73 = vld [vmem:[#allocation5 + $0x58] sm:$0xff]
    %v74 = vld [vmem:[#allocation5 + $0x60] sm:$0xff]
    %v75 = vld [vmem:[#allocation5 + $0x68] sm:$0xff]
    %v76 = vld [vmem:[#allocation5 + $0x70] sm:$0xff]
    %v77 = vld [vmem:[#allocation5 + $0x78] sm:$0xff]
    %v78 = vld [vmem:[#allocation5 + $0x80] sm:$0xff]
    %v79 = vld [vmem:[#allocation5 + $0x88] sm:$0xff]
    %v80 = vld [vmem:[#allocation5 + $0x90] sm:$0xff]
    %v81 = vld [vmem:[#allocation5 + $0x98] sm:$0xff]
    %v82 = vld [vmem:[#allocation5 + $0xa0] sm:$0xff]
    %v83 = vld [vmem:[#allocation5 + $0xa8] sm:$0xff]
    %v84 = vld [vmem:[#allocation5 + $0xb0] sm:$0xff]
    %v85 = vld [vmem:[#allocation5 + $0xb8] sm:$0xff]
    %v86 = vld [vmem:[#allocation5 + $0xc0] sm:$0xff]
    %v87 = vld [vmem:[#allocation5 + $0xc8] sm:$0xff]
    %v88 = vld [vmem:[#allocation5 + $0xd0] sm:$0xff]
    %v89 = vld [vmem:[#allocation5 + $0xd8] sm:$0xff]
    %v90 = vld [vmem:[#allocation5 + $0xe0] sm:$0xff]
    %v91 = vld [vmem:[#allocation5 + $0xe8] sm:$0xff]
    %v92 = vld [vmem:[#allocation5 + $0xf0] sm:$0xff]
    %v93 = vld [vmem:[#allocation5 + $0xf8] sm:$0xff]
    %v94 = vld [vmem:[#allocation5 + $0x100] sm:$0xff]
    %v95 = vld [vmem:[#allocation5 + $0x108] sm:$0xff]
    %v96 = vld [vmem:[#allocation5 + $0x110] sm:$0xff]
    %v97 = vld [vmem:[#allocation5 + $0x118] sm:$0xff]
    %v98 = vld [vmem:[#allocation5 + $0x120] sm:$0xff]
    %v99 = vld [vmem:[#allocation5 + $0x128] sm:$0xff]
    %v100 = vld [vmem:[#allocation5 + $0x130] sm:$0xff]
    %v101 = vld [vmem:[#allocation5 + $0x138] sm:$0xff]
    %v102 = vld [vmem:[#allocation5 + $0x140] sm:$0xff]
    %v103 = vld [vmem:[#allocation5 + $0x148] sm:$0xff]
    %v104 = vld [vmem:[#allocation5 + $0x150] sm:$0xff]
    %v105 = vld [vmem:[#allocation5 + $0x158] sm:$0xff]
    %v106 = vld [vmem:[#allocation5 + $0x160] sm:$0xff]
    %v107 = vld [vmem:[#allocation5 + $0x168] sm:$0xff]
    %v108 = vld [vmem:[#allocation5 + $0x170] sm:$0xff]
    %v109 = vld [vmem:[#allocation5 + $0x178] sm:$0xff]
    %v110 = vld [vmem:[#allocation7] sm:$0x7]
    %v112 = vperm.slane %v110, 0
    %v113 = vperm.slane %v110, 1
    %v114 = vperm.slane %v110, 2
    %118 = vmatpush.xpose.msra.mxu0 %v77
    %119 = vmatpush.xpose.msra.mxu0 %v76
    %120 = vmatpush.xpose.msra.mxu0 %v75
    %121 = vmatpush.xpose.msra.mxu0 %v74
    %122 = vmatpush.xpose.msra.mxu0 %v73
    %123 = vmatpush.xpose.msra.mxu0 %v72
    %124 = vmatpush.xpose.msra.mxu0 %v71
    %125 = vmatpush.xpose.msra.mxu0 %v70
    %126 = vmatpush.xpose.msra.mxu0 %v69
    %127 = vmatpush.xpose.msra.mxu0 %v68
    %128 = vmatpush.xpose.msra.mxu0 %v67
    %129 = vmatpush.xpose.msra.mxu0 %v66
    %130 = vmatpush.xpose.msra.mxu0 %v65
    %131 = vmatpush.xpose.msra.mxu0 %v64
    %132 = vmatpush.xpose.msra.mxu0 %v63
    %133 = vmatpush.xpose.msra.mxu0 %v62
    %134 = vmatmul.f32.gmra.mxu0 %v60
    %v135 = vpop.f32.mrf.mxu0
    %v136 = vadd.f32 %v112, %v135
    %137 = vmatmul.f32.gmra.mxu0 %v61
    %v138 = vpop.f32.mrf.mxu0
    %v139 = vadd.f32 %v112, %v138
    %140 = vdwg.mxu0
    %141 = vmatpush.xpose.msra.mxu0 %v93
    %142 = vmatpush.xpose.msra.mxu0 %v92
    %143 = vmatpush.xpose.msra.mxu0 %v91
    %144 = vmatpush.xpose.msra.mxu0 %v90
    %145 = vmatpush.xpose.msra.mxu0 %v89
    %146 = vmatpush.xpose.msra.mxu0 %v88
    %147 = vmatpush.xpose.msra.mxu0 %v87
    %148 = vmatpush.xpose.msra.mxu0 %v86
    %149 = vmatpush.xpose.msra.mxu0 %v85
    %150 = vmatpush.xpose.msra.mxu0 %v84
    %151 = vmatpush.xpose.msra.mxu0 %v83
    %152 = vmatpush.xpose.msra.mxu0 %v82
    %153 = vmatpush.xpose.msra.mxu0 %v81
    %154 = vmatpush.xpose.msra.mxu0 %v80
    %155 = vmatpush.xpose.msra.mxu0 %v79
    %156 = vmatpush.xpose.msra.mxu0 %v78
    %157 = vmatmul.f32.gmra.mxu0 %v60
    %v158 = vpop.f32.mrf.mxu0
    %v159 = vadd.f32 %v113, %v158
    %160 = vmatmul.f32.gmra.mxu0 %v61
    %v161 = vpop.f32.mrf.mxu0
    %v162 = vadd.f32 %v113, %v161
    %163 = vdwg.mxu0
    %164 = vmatpush.xpose.msra.mxu0 %v109
    %165 = vmatpush.xpose.msra.mxu0 %v108
    %166 = vmatpush.xpose.msra.mxu0 %v107
    %167 = vmatpush.xpose.msra.mxu0 %v106
    %168 = vmatpush.xpose.msra.mxu0 %v105
    %169 = vmatpush.xpose.msra.mxu0 %v104
    %170 = vmatpush.xpose.msra.mxu0 %v103
    %171 = vmatpush.xpose.msra.mxu0 %v102
    %172 = vmatpush.xpose.msra.mxu0 %v101
    %173 = vmatpush.xpose.msra.mxu0 %v100
    %174 = vmatpush.xpose.msra.mxu0 %v99
    %175 = vmatpush.xpose.msra.mxu0 %v98
    %176 = vmatpush.xpose.msra.mxu0 %v97
    %177 = vmatpush.xpose.msra.mxu0 %v96
    %178 = vmatpush.xpose.msra.mxu0 %v95
    %179 = vmatpush.xpose.msra.mxu0 %v94
    %180 = vmatmul.f32.gmra.mxu0 %v60
    %v181 = vpop.f32.mrf.mxu0
    %v182 = vadd.f32 %v114, %v181
    %183 = vmatmul.f32.gmra.mxu0 %v61
    %v184 = vpop.f32.mrf.mxu0
    %v185 = vadd.f32 %v114, %v184
    %186 = vdwg.mxu0
    %187 = vst [vmem:[#allocation8] sm:$0xff] %v136
    %188 = vst [vmem:[#allocation8 + $0x8] sm:$0xff] %v159
    %189 = vst [vmem:[#allocation8 + $0x10] sm:$0xff] %v182
    %190 = vst [vmem:[#allocation8 + $0x18] sm:$0xff] %v139
    %191 = vst [vmem:[#allocation8 + $0x20] sm:$0xff] %v162
    %192 = vst [vmem:[#allocation8 + $0x28] sm:$0xff] %v185
    // Predicated region
    $region26: #{tpu_custom_call.1} parent=1 // pred_check
      _
    $region27: #{tpu_custom_call.1} parent=1 // pred_check_branch
      %194 = sbr.rel (0) target = $region29
    $region28: #{tpu_custom_call.1} parent=1 // pred_region
      %196 = vsyncadd [#allocation4], 0
      %s197 = sshll.u32 [#allocation8], 4
      %s198 = int_to_ptr.vmem [resolvable:$true] %s197
      %s199 = sshll.u32 %s3, 4
      %s200 = int_to_ptr.hbm [resolvable:$true] %s199
      %205 = dma.vmem_to_hbm [thread:$0]  %s198, 768, %s200, [#allocation4], 384, 384, 24
    $region29: #{tpu_custom_call.1} parent=1 // pred_fallthru
      _
    // Predicated region
    $region30: #{tpu_custom_call.1} parent=1 // pred_check
      _
    $region31: #{tpu_custom_call.1} parent=1 // pred_check_branch
      %207 = sbr.rel (0) target = $region33
    $region32: #{tpu_custom_call.1} parent=1 // pred_region
      %209 = dma.done [#allocation4], 768
    $region33: #{tpu_custom_call.1} parent=1 // pred_fallthru
      _
    %210 = vsyncpa [#allocation3], 1
    %211 = vsyncpa [#allocation6], 1
    %212 = vsyncpa [#allocation4], 1

</llo_original>
